<compile_context>
chip_gen: v6e
topology: v6e:2x2x1
jax: 0.10.0
libtpu: 0.0.40
codegen_flags: <defaults>
</compile_context>

<pallas_src>
import functools

import jax
import jax.numpy as jnp
from jax.experimental import pallas as pl
from jax.experimental.pallas import tpu as pltpu


def _round_up(x, m):
    return ((x + m - 1) // m) * m


def _vmem_capacity_bytes():
    """Physical per-TensorCore VMEM; falls back to the smallest (v7x, 64 MiB)."""
    try:
        info = pltpu.get_tpu_info()
        cap = int(getattr(info, "vmem_capacity_bytes", 0) or 0)
        if cap > 0:
            return cap
    except Exception:
        pass
    return 64 << 20


# ---------------------------------------------------------------------------
# Kernels
# ---------------------------------------------------------------------------
def _pool_fc_kernel(x_ref, wt_ref, b_ref, o_ref, *, reduce_axis):
    # x_ref : (tb, C, HW) [NCHW path, reduce over lanes] or (tb, HW, C)
    #         [channels-last path, reduce over sublanes]; native dtype (bf16/f32).
    # wt_ref: (C, OUT) f32, transposed weight pre-scaled by 1/HW (VMEM-resident).
    # b_ref : (1, OUT) f32 (resident).
    # o_ref : (tb, OUT) f32.
    #
    # Sum directly into f32 (no materialized f32 copy of the x tile); the 1/HW
    # pooling scale is folded into the weight so the kernel only sums.  The
    # convert+reduce VPU/XLU work hides under the x DMA (kernel is HBM-bound).
    pooled = jnp.sum(x_ref[...], axis=reduce_axis, dtype=jnp.float32)   # (tb, C)
    out = jnp.dot(pooled, wt_ref[...], preferred_element_type=jnp.float32)
    o_ref[...] = out + b_ref[...]


def _fc_kernel(x_ref, wt_ref, b_ref, o_ref, acc_ref):
    # with_avg_pool=False path, K-tiled:
    #   x_ref (tb, tk), wt_ref (tk, OUT) f32, acc_ref (tb, OUT) f32 scratch.
    k = pl.program_id(1)

    @pl.when(k == 0)
    def _():
        acc_ref[...] = jnp.zeros_like(acc_ref)

    acc_ref[...] += jnp.dot(x_ref[...].astype(jnp.float32), wt_ref[...],
                            preferred_element_type=jnp.float32)

    @pl.when(k == pl.num_programs(1) - 1)
    def _():
        o_ref[...] = acc_ref[...] + b_ref[...]


# ---------------------------------------------------------------------------
# Tiling heuristics
# ---------------------------------------------------------------------------
def _pick_batch_tile(batch, row_cost_bytes, *, budget_bytes, max_tile):
    """Largest batch tile whose per-step VMEM cost fits the budget.

    Output-BlockSpec sublane rule: the tile must equal the full batch or be a
    multiple of 8.  For batch >= 32 the tile is also capped so the grid has at
    least 4 steps (>= 2 pipelined tiles per TensorCore on v7x megacore).
    """
    if batch <= 8:
        return batch
    fit = budget_bytes // max(row_cost_bytes, 1)
    tb = min(batch, max_tile, max(int(fit), 8))
    if batch >= 32:
        tb = min(tb, max(8, ((batch // 4) // 8) * 8))
    if tb >= batch:
        return batch
    return max(8, (tb // 8) * 8)


def _pick_k_tile(d, max_tk):
    """K tile: multiple of 128 that divides d exactly (no OOB garbage enters the
    K accumulation), or the full d if nothing fits/divides."""
    if d <= max_tk:
        return d
    t = (min(max_tk, d) // 128) * 128
    while t >= 128:
        if d % t == 0:
            return t
        t -= 128
    return d


# ---------------------------------------------------------------------------
# Wrapper
# ---------------------------------------------------------------------------
def neck_linear(x, weight, bias, *, with_avg_pool=True, channels_last=False,
                max_batch_tile=256, max_k_tile=2048):
    """Pallas equivalent of neck_Linear.forward.

    x      : (B, C, H, W) NCHW (default) or (B, H, W, C) if channels_last=True.
             Any float dtype; DMA'd in its native dtype (bf16 halves traffic).
    weight : (out_dim, in_dim) float32 (PyTorch nn.Linear layout).
    bias   : (out_dim,) float32.
    Returns (B, out_dim) float32.
    """
    if channels_last:
        B, H, W, C = x.shape
    else:
        B, C, H, W = x.shape
    out_dim, in_dim = weight.shape
    hw = H * W

    vmem_cap = _vmem_capacity_bytes()
    x_budget = (vmem_cap * 3) // 5        # ~38 MiB on v7x (64 MiB), ~77 MiB on v5e/v6e
    vmem_ceiling = (vmem_cap * 3) // 4    # scoped-VMEM cap we are willing to request

    bias2 = bias.reshape(1, out_dim).astype(jnp.float32)
    itemsize = x.dtype.itemsize

    if with_avg_pool:
        assert in_dim == C, "with avg-pool, fc in_dim must equal channel count"
        # Fold the 1/(H*W) pooling scale into the weight: kernel only sums.
        wt = (weight.T / jnp.float32(hw)).astype(jnp.float32)        # (C, out_dim)

        if channels_last:
            # NHWC contract: merge H,W (contiguous dims -> free reshape);
            # C sits on lanes (lane-dense DMA), HW on sublanes.
            x_in = x.reshape(B, hw, C)
            reduce_axis = 1
            # Per-row VMEM cost of the double-buffered x tile (sublane/lane padded).
            row_cost = 2 * _round_up(hw, 32) * _round_up(C, 128) * itemsize
        else:
            # NCHW: merge H,W (free reshape) -> (B, C, HW); pooling is an
            # in-kernel lane-reduce.  No wrapper transpose, no extra HBM pass.
            # The HW lane dim pads to 128 in VMEM (counted below), but HBM
            # traffic stays at the logical size.
            x_in = x.reshape(B, C, hw)
            reduce_axis = 2
            row_cost = 2 * _round_up(C, 32) * _round_up(hw, 128) * itemsize
        # TODO(synk): tile the HW axis too if a single 8-row slab exceeds VMEM
        # (not needed for ResNet-style 7x7 / 16x16 feature maps).

        tb = _pick_batch_tile(B, row_cost, budget_bytes=x_budget,
                              max_tile=max_batch_tile)
        grid = (pl.cdiv(B, tb),)
        # NOTE: if B % tb != 0 the last x block reads past the array.  This is
        # benign: every output row depends only on its own input rows, and
        # Pallas masks out-of-bounds output writes.
        x_block = (tb, hw, C) if channels_last else (tb, C, hw)
        in_specs = [
            pl.BlockSpec(x_block, lambda b: (b, 0, 0)),        # pipelined x
            pl.BlockSpec((C, out_dim), lambda b: (0, 0)),      # weight (resident)
            pl.BlockSpec((1, out_dim), lambda b: (0, 0)),      # bias (resident)
        ]
        out_spec = pl.BlockSpec((tb, out_dim), lambda b: (b, 0))
        kernel = functools.partial(_pool_fc_kernel, reduce_axis=reduce_axis)
        scratch_shapes = ()
        dim_sem = ("parallel",)            # batch tiles are independent (megacore)

        # TODO(synk): single-buffer the constant-index weight/bias blocks
        # (pl.Buffered(1)) once that path is exercised; counted as 2x here.
        wt_bytes = 2 * _round_up(C, 8) * _round_up(out_dim, 128) * 4
        needed = (tb * row_cost                              # double-buffered x
                  + tb * _round_up(C, 128) * 4               # pooled f32
                  + 2 * tb * _round_up(out_dim, 128) * 4     # output double-buffer
                  + wt_bytes + 2 * 8 * _round_up(out_dim, 128) * 4)
        flops = 2 * B * C * out_dim + B * hw * C
        bytes_accessed = (B * hw * C * itemsize + C * out_dim * 4
                          + out_dim * 4 + B * out_dim * 4)
    else:
        D = in_dim
        assert D == C * H * W, "fc in_dim must equal flattened feature size"
        x_in = x.reshape(B, D)                               # free reshape, lane-dense
        wt = weight.T.astype(jnp.float32)                    # (D, out_dim)

        tk = _pick_k_tile(D, max_k_tile)
        row_cost = (_round_up(tk, 128) * (2 * itemsize + 4)  # x dbl-buf + f32 cast
                    + 3 * _round_up(out_dim, 128) * 4)       # acc + out dbl-buf
        tb = _pick_batch_tile(B, row_cost, budget_bytes=x_budget,
                              max_tile=max_batch_tile)
        grid = (pl.cdiv(B, tb), D // tk)                     # K last, "arbitrary"
        in_specs = [
            pl.BlockSpec((tb, tk), lambda b, k: (b, k)),
            pl.BlockSpec((tk, out_dim), lambda b, k: (k, 0)),
            pl.BlockSpec((1, out_dim), lambda b, k: (0, 0)),
        ]
        out_spec = pl.BlockSpec((tb, out_dim), lambda b, k: (b, 0))
        kernel = _fc_kernel
        scratch_shapes = (pltpu.VMEM((tb, out_dim), jnp.float32),)
        dim_sem = ("parallel", "arbitrary")

        needed = (2 * tb * _round_up(tk, 128) * itemsize
                  + tb * _round_up(tk, 128) * 4
                  + 2 * _round_up(tk, 8) * _round_up(out_dim, 128) * 4
                  + 3 * tb * _round_up(out_dim, 128) * 4
                  + 2 * 8 * _round_up(out_dim, 128) * 4)
        flops = 2 * B * D * out_dim
        bytes_accessed = (B * D * itemsize + D * out_dim * 4
                          + out_dim * 4 + B * out_dim * 4)

    vmem_limit = int(min(max(needed + (8 << 20), 32 << 20), vmem_ceiling))

    # The kernel is HBM-bound on reading x; advertise the real traffic/FLOPs so
    # XLA schedules the custom call sensibly (the matmul is negligible).
    cost = pl.CostEstimate(flops=int(flops), transcendentals=0,
                           bytes_accessed=int(bytes_accessed))

    return pl.pallas_call(
        kernel,
        out_shape=jax.ShapeDtypeStruct((B, out_dim), jnp.float32),
        grid=grid,
        in_specs=in_specs,
        out_specs=out_spec,
        scratch_shapes=scratch_shapes,
        compiler_params=pltpu.CompilerParams(
            dimension_semantics=dim_sem,
            vmem_limit_bytes=vmem_limit,
        ),
        cost_estimate=cost,
    )(x_in, wt, bias2)


if __name__ == "__main__":
    key = jax.random.PRNGKey(0)
    kx, kw, kb, kx2, kw2, kx3, kw3 = jax.random.split(key, 7)

    OUT = 128

    # --- 1) small NCHW f32 example consistent with the module ---------------
    B, C, H, W = 2, 32, 16, 16
    x = jax.random.normal(kx, (B, C, H, W), dtype=jnp.float32)
    bound = 1.0 / (C ** 0.5)
    weight = jax.random.uniform(kw, (OUT, C), minval=-bound, maxval=bound,
                                dtype=jnp.float32)
    bias = jax.random.uniform(kb, (OUT,), minval=-bound, maxval=bound,
                              dtype=jnp.float32)
    out = jax.block_until_ready(neck_linear(x, weight, bias))
    ref = jnp.mean(x, axis=(2, 3)) @ weight.T + bias
    assert out.shape == (B, OUT)
    assert jnp.allclose(out, ref, atol=1e-3, rtol=1e-3)

    # --- 2) bf16 NCHW (ResNet-like 7x7), ragged multi-step batch grid -------
    #        exercises the pipelined in-kernel pooling path + masked last tile
    B2, C2, H2, W2 = 12, 256, 7, 7
    x2 = jax.random.normal(kx2, (B2, C2, H2, W2),
                           dtype=jnp.float32).astype(jnp.bfloat16)
    w2 = jax.random.uniform(kw2, (OUT, C2), minval=-0.05, maxval=0.05,
                            dtype=jnp.float32)
    out2 = jax.block_until_ready(neck_linear(x2, w2, bias, max_batch_tile=8))
    ref2 = jnp.mean(x2.astype(jnp.float32), axis=(2, 3)) @ w2.T + bias
    assert out2.shape == (B2, OUT)
    assert jnp.allclose(out2, ref2, atol=5e-3, rtol=5e-3)

    # --- 3) channels-last (NHWC) contract: lane-dense x tiles ---------------
    B3, H3, W3, C3 = 4, 7, 7, 128
    x3 = jax.random.normal(kx3, (B3, H3, W3, C3), dtype=jnp.float32)
    w3 = jax.random.uniform(kw3, (OUT, C3), minval=-0.05, maxval=0.05,
                            dtype=jnp.float32)
    out3 = jax.block_until_ready(neck_linear(x3, w3, bias, channels_last=True))
    ref3 = jnp.mean(x3, axis=(1, 2)) @ w3.T + bias
    assert jnp.allclose(out3, ref3, atol=1e-3, rtol=1e-3)

    # --- 4) with_avg_pool=False path (K-tiled accumulator) ------------------
    B4, C4, H4, W4 = 2, 4, 8, 8
    IN4 = C4 * H4 * W4
    x4 = jax.random.normal(kx, (B4, C4, H4, W4), dtype=jnp.float32)
    w4 = jax.random.uniform(kw, (OUT, IN4), minval=-0.1, maxval=0.1,
                            dtype=jnp.float32)
    out4 = jax.block_until_ready(
        neck_linear(x4, w4, bias, with_avg_pool=False, max_k_tile=128))
    ref4 = x4.reshape(B4, IN4) @ w4.T + bias
    assert jnp.allclose(out4, ref4, atol=1e-3, rtol=1e-3)

    print("KERNEL_OK")
</pallas_src>

<mosaic_0001>
module attributes {stable_mosaic.version = 11 : i64} {
  func.func @_pool_fc_kernel(%arg0: i32, %arg1: memref<2x32x256xf32, #tpu.memory_space<vmem>>, %arg2: memref<32x128xf32, #tpu.memory_space<vmem>>, %arg3: memref<1x128xf32, #tpu.memory_space<vmem>>, %arg4: memref<2x128xf32, #tpu.memory_space<vmem>>) attributes {dimension_semantics = [#tpu.dimension_semantics<parallel>], iteration_bounds = array<i64: 1>, scalar_prefetch = 0 : i64, scratch_operands = 0 : i64, tpu.core_type = #tpu.core_type<tc>, window_params = [{transform_indices = @transform_0, window_bounds = array<i64: 2, 32, 256>}, {pipeline_mode = #tpu.pipeline_mode<synchronous>, transform_indices = @transform_1, window_bounds = array<i64: 32, 128>}, {pipeline_mode = #tpu.pipeline_mode<synchronous>, transform_indices = @transform_2, window_bounds = array<i64: 1, 128>}, {transform_indices = @transform_3, window_bounds = array<i64: 2, 128>}]} {
    %c0 = arith.constant 0 : index
    %c0_0 = arith.constant 0 : index
    %c0_1 = arith.constant 0 : index
    %0 = vector.load %arg1[%c0, %c0_0, %c0_1] : memref<2x32x256xf32, #tpu.memory_space<vmem>>, vector<2x32x256xf32>
    %cst = arith.constant dense<0.000000e+00> : vector<2x32xf32>
    %1 = vector.multi_reduction <add>, %0, %cst [2] : vector<2x32x256xf32> to vector<2x32xf32>
    %c0_2 = arith.constant 0 : index
    %c0_3 = arith.constant 0 : index
    %2 = vector.load %arg2[%c0_2, %c0_3] : memref<32x128xf32, #tpu.memory_space<vmem>>, vector<32x128xf32>
    %cst_4 = arith.constant dense<0.000000e+00> : vector<2x128xf32>
    %3 = tpu.matmul %1, %2, %cst_4 {dimension_numbers = #tpu.dot_dimension_numbers<[1], [0], [0], [1], [0, 0, 1, 1], [], []>} : vector<2x32xf32>, vector<32x128xf32>, vector<2x128xf32> -> vector<2x128xf32>
    %c0_5 = arith.constant 0 : index
    %c0_6 = arith.constant 0 : index
    %4 = vector.load %arg3[%c0_5, %c0_6] : memref<1x128xf32, #tpu.memory_space<vmem>>, vector<1x128xf32>
    %5 = vector.broadcast %4 : vector<1x128xf32> to vector<2x128xf32>
    %6 = arith.addf %3, %5 : vector<2x128xf32>
    %c0_7 = arith.constant 0 : index
    %c0_8 = arith.constant 0 : index
    %7 = vector.load %arg4[%c0_7, %c0_8] : memref<2x128xf32, #tpu.memory_space<vmem>>, vector<2x128xf32>
    tpu.vector_store %arg4[%c0_7, %c0_8], %6 {strides = array<i32>} : memref<2x128xf32, #tpu.memory_space<vmem>>, vector<2x128xf32>,
    return
  }
  func.func @transform_0(%arg0: i32) -> (i32, i32, i32) {
    %c0_i32 = arith.constant 0 : i32
    %c0_i32_0 = arith.constant 0 : i32
    %c0_i32_1 = arith.constant 0 : i32
    return %arg0, %c0_i32, %c0_i32_0 : i32, i32, i32
  }
  func.func @transform_1(%arg0: i32) -> (i32, i32) {
    %c0_i32 = arith.constant 0 : i32
    %c0_i32_0 = arith.constant 0 : i32
    %c0_i32_1 = arith.constant 0 : i32
    return %c0_i32, %c0_i32_0 : i32, i32
  }
  func.func @transform_2(%arg0: i32) -> (i32, i32) {
    %c0_i32 = arith.constant 0 : i32
    %c0_i32_0 = arith.constant 0 : i32
    %c0_i32_1 = arith.constant 0 : i32
    return %c0_i32, %c0_i32_0 : i32, i32
  }
  func.func @transform_3(%arg0: i32) -> (i32, i32) {
    %c0_i32 = arith.constant 0 : i32
    %c0_i32_0 = arith.constant 0 : i32
    return %arg0, %c0_i32 : i32, i32
  }
}

</mosaic_0001>

<llo_original>
// kernel: tpu_custom_call.1
$region0: #{tpu_custom_call.1}
  #allocation0 [shape = 'u32[]', space=smem, size = 0x4, offset = 0x4, fixed_abs, tag = 'smem constant byte address 0x4 - core index']
  #allocation1 [shape = 'u32[144,128]{1,0:T(1,128)}', space=vmem, size = 0x12000, scoped, tag = 'internal scratch']
  %s0 = inlined_call_operand.hbm [shape: f32[2,32,256], index: 0, kind: input, shape index: {}]
  %s1 = inlined_call_operand.hbm [shape: f32[32,128], index: 1, kind: input, shape index: {}]
  %s2 = inlined_call_operand.vmem [shape: f32[1,128], index: 2, kind: input, shape index: {}]
  %s3 = inlined_call_operand.hbm [shape: f32[2,128], index: 3, kind: output, shape index: {}]
  %s4 = sld [smem:[#allocation0]]
  $region30: #{tpu_custom_call.1} parent=0
    _
  %s6 = ssub.s32 1, %s4
  %s7 = scalar_select 0, %s6, %s4
  $region1: #{tpu_custom_call.1} parent=0
    #allocation2 [shape = 'u8[65536]{0}', space=vmem, size = 0x10000, scoped, tag = 'input window, operand 0, single buffered']
    #allocation3 [shape = 's32[1]{0}', space=sflag, size = 0x4, scoped, tag = 'scoped memory for tpu_custom_call.1']
    #allocation4 [shape = 's32[1]{0}', space=sflag, size = 0x4, scoped, tag = 'scoped memory for tpu_custom_call.1']
    #allocation5 [shape = 'u8[16384]{0}', space=vmem, size = 0x4000, scoped, tag = 'input window, operand 1, single buffered']
    #allocation6 [shape = 's32[1]{0}', space=sflag, size = 0x4, scoped, tag = 'scoped memory for tpu_custom_call.1']
    #allocation7 [shape = 'u8[1024]{0}', space=vmem, size = 0x400, scoped, tag = 'output window, operand 0, single buffered']
    %8 = vsyncpa [#allocation3], 0
    %9 = vsyncpa [#allocation6], 0
    %10 = vsyncpa [#allocation4], 0
    // Predicated region
    $region2: #{tpu_custom_call.1} parent=1 // pred_check
      _
    $region3: #{tpu_custom_call.1} parent=1 // pred_check_branch
      %12 = sbr.rel (0) target = $region5
    $region4: #{tpu_custom_call.1} parent=1 // pred_region
      %s14 = ssub.s32 2048, 2048
      %15 = vsyncadd [#allocation3], %s14
      %s16 = sshll.u32 [#allocation2], 4
      %s17 = int_to_ptr.vmem [resolvable:$true] %s16
      %22 = dma.hbm_to_vmem [thread:$0]  %s0, 2048, %s17, [#allocation3], 256, 256, 16
    $region5: #{tpu_custom_call.1} parent=1 // pred_fallthru
      _
    // Predicated region
    $region6: #{tpu_custom_call.1} parent=1 // pred_check
      _
    $region7: #{tpu_custom_call.1} parent=1 // pred_check_branch
      %24 = sbr.rel (0) target = $region9
    $region8: #{tpu_custom_call.1} parent=1 // pred_region
      %s26 = ssub.s32 512, 512
      %27 = vsyncadd [#allocation6], %s26
      %s28 = sshll.u32 [#allocation5], 4
      %s29 = int_to_ptr.vmem [resolvable:$true] %s28
      %34 = dma.hbm_to_vmem [thread:$0]  %s1, 512, %s29, [#allocation6], 128, 128, 8
    $region9: #{tpu_custom_call.1} parent=1 // pred_fallthru
      _
    // Predicated region
    $region10: #{tpu_custom_call.1} parent=1 // pred_check
      _
    $region11: #{tpu_custom_call.1} parent=1 // pred_check_branch
      %36 = sbr.rel (0) target = $region13
    $region12: #{tpu_custom_call.1} parent=1 // pred_region
      _
    $region13: #{tpu_custom_call.1} parent=1 // pred_fallthru
      _
    // Predicated region
    $region14: #{tpu_custom_call.1} parent=1 // pred_check
      _
    $region15: #{tpu_custom_call.1} parent=1 // pred_check_branch
      %38 = sbr.rel (0) target = $region17
    $region16: #{tpu_custom_call.1} parent=1 // pred_region
      %39 = dma.done [#allocation3], 2048
    $region17: #{tpu_custom_call.1} parent=1 // pred_fallthru
      _
    // Predicated region
    $region18: #{tpu_custom_call.1} parent=1 // pred_check
      _
    $region19: #{tpu_custom_call.1} parent=1 // pred_check_branch
      %41 = sbr.rel (0) target = $region21
    $region20: #{tpu_custom_call.1} parent=1 // pred_region
      %42 = dma.done [#allocation6], 512
    $region21: #{tpu_custom_call.1} parent=1 // pred_fallthru
      _
    %v43 = vld [vmem:[#allocation2] sm:$0xff]
    %v44 = vld [vmem:[#allocation2 + $0x8] sm:$0xff]
    %v45 = vld [vmem:[#allocation2 + $0x10] sm:$0xff]
    %v46 = vld [vmem:[#allocation2 + $0x18] sm:$0xff]
    %v47 = vld [vmem:[#allocation2 + $0x20] sm:$0xff]
    %v48 = vld [vmem:[#allocation2 + $0x28] sm:$0xff]
    %v49 = vld [vmem:[#allocation2 + $0x30] sm:$0xff]
    %v50 = vld [vmem:[#allocation2 + $0x38] sm:$0xff]
    %v51 = vld [vmem:[#allocation2 + $0x40] sm:$0xff]
    %v52 = vld [vmem:[#allocation2 + $0x48] sm:$0xff]
    %v53 = vld [vmem:[#allocation2 + $0x50] sm:$0xff]
    %v54 = vld [vmem:[#allocation2 + $0x58] sm:$0xff]
    %v55 = vld [vmem:[#allocation2 + $0x60] sm:$0xff]
    %v56 = vld [vmem:[#allocation2 + $0x68] sm:$0xff]
    %v57 = vld [vmem:[#allocation2 + $0x70] sm:$0xff]
    %v58 = vld [vmem:[#allocation2 + $0x78] sm:$0xff]
    %v59 = vadd.f32 %v43, %v44
    %60 = vadd.xlane.f32.xlu0 %v59
    %v61 = vpop.xlane.xlu0 %60
    %v62 = vadd.f32 %v45, %v46
    %63 = vadd.xlane.f32.xlu0 %v62
    %v64 = vpop.xlane.xlu0 %63
    %v65 = vadd.f32 %v47, %v48
    %66 = vadd.xlane.f32.xlu0 %v65
    %v67 = vpop.xlane.xlu0 %66
    %v68 = vadd.f32 %v49, %v50
    %69 = vadd.xlane.f32.xlu0 %v68
    %v70 = vpop.xlane.xlu0 %69
    %v71 = vadd.f32 %v51, %v52
    %72 = vadd.xlane.f32.xlu0 %v71
    %v73 = vpop.xlane.xlu0 %72
    %v74 = vadd.f32 %v53, %v54
    %75 = vadd.xlane.f32.xlu0 %v74
    %v76 = vpop.xlane.xlu0 %75
    %v77 = vadd.f32 %v55, %v56
    %78 = vadd.xlane.f32.xlu0 %v77
    %v79 = vpop.xlane.xlu0 %78
    %v80 = vadd.f32 %v57, %v58
    %81 = vadd.xlane.f32.xlu0 %v80
    %v82 = vpop.xlane.xlu0 %81
    %v83 = vld [vmem:[#allocation5] sm:$0xff]
    %v84 = vld [vmem:[#allocation5 + $0x8] sm:$0xff]
    %v85 = vld [vmem:[#allocation5 + $0x10] sm:$0xff]
    %v86 = vld [vmem:[#allocation5 + $0x18] sm:$0xff]
    %v87 = vld [vmem:[%s2] sm:$0x1]
    %v89 = vlaneseq
    %v90 = vshrl.u32 %v89, 7
    %v91 = vsub.s32 0, %v90
    %v92 = vrot.slane %v87, %v91
    %v102 = vlaneseq
    %v103 = vand.u32 %v102, 127
    %v104 = vlaneseq
    %v105 = vshrl.u32 %v104, 7
    %v106 = vsub.s32 %v103, %v105
    %v107 = vrot.slane %v61, %v106
    %v108 = vadd.s32 %v103, 4294967288
    %v109 = vlaneseq
    %v110 = vshrl.u32 %v109, 7
    %v111 = vsub.s32 %v108, %v110
    %v112 = vrot.slane %v64, %v111
    %vm113 = vcmask 130112
    %v114 = vsel %vm113, %v112, %v107
    %v115 = vadd.s32 %v103, 4294967280
    %v116 = vlaneseq
    %v117 = vshrl.u32 %v116, 7
    %v118 = vsub.s32 %v115, %v117
    %v119 = vrot.slane %v67, %v118
    %vm120 = vcmask 195712
    %v121 = vsel %vm120, %v119, %v114
    %v122 = vadd.s32 %v103, 4294967272
    %v123 = vlaneseq
    %v124 = vshrl.u32 %v123, 7
    %v125 = vsub.s32 %v122, %v124
    %v126 = vrot.slane %v70, %v125
    %vm127 = vcmask 261312
    %v128 = vsel %vm127, %v126, %v121
    %v129 = vlaneseq
    %v130 = vshrl.u32 %v129, 7
    %v131 = vsub.s32 %v103, %v130
    %v132 = vrot.slane %v73, %v131
    %v133 = vlaneseq
    %v134 = vshrl.u32 %v133, 7
    %v135 = vsub.s32 %v108, %v134
    %v136 = vrot.slane %v76, %v135
    %v137 = vsel %vm113, %v136, %v132
    %v138 = vlaneseq
    %v139 = vshrl.u32 %v138, 7
    %v140 = vsub.s32 %v115, %v139
    %v141 = vrot.slane %v79, %v140
    %v142 = vsel %vm120, %v141, %v137
    %v143 = vlaneseq
    %v144 = vshrl.u32 %v143, 7
    %v145 = vsub.s32 %v122, %v144
    %v146 = vrot.slane %v82, %v145
    %v147 = vsel %vm127, %v146, %v142
    %vm148 = vcmask 1041409
    %v149 = vsel %vm148, %v147, %v128
    %vm150 = vcmask 261120
    %v151 = vsel %vm150, %v149, 0
    %153 = vmatprep.subr.mxu0 0.0
    %154 = vmatpush1.msra.mxu0 0.0
    %155 = vmatprep.subr.mxu0 0.0
    %156 = vmatpush1.msra.mxu0 0.0
    %157 = vmatprep.subr.mxu0 0.0
    %158 = vmatpush1.msra.mxu0 0.0
    %159 = vmatprep.subr.mxu0 0.0
    %160 = vmatpush1.msra.mxu0 0.0
    %161 = vmatprep.subr.mxu0 0.0
    %162 = vmatpush1.msra.mxu0 0.0
    %163 = vmatprep.subr.mxu0 0.0
    %164 = vmatpush1.msra.mxu0 0.0
    %165 = vmatprep.subr.mxu0 0.0
    %166 = vmatpush1.msra.mxu0 0.0
    %167 = vmatprep.subr.mxu0 0.0
    %168 = vmatpush1.msra.mxu0 0.0
    %169 = vmatprep.subr.mxu0 0.0
    %170 = vmatpush1.msra.mxu0 0.0
    %171 = vmatprep.subr.mxu0 0.0
    %172 = vmatpush1.msra.mxu0 0.0
    %173 = vmatprep.subr.mxu0 0.0
    %174 = vmatpush1.msra.mxu0 0.0
    %175 = vmatprep.subr.mxu0 0.0
    %176 = vmatpush1.msra.mxu0 0.0
    %177 = vmatprep.subr.mxu0 0.0
    %178 = vmatpush1.msra.mxu0 %v86
    %179 = vmatprep.subr.mxu0 0.0
    %180 = vmatpush1.msra.mxu0 %v85
    %181 = vmatprep.subr.mxu0 0.0
    %182 = vmatpush1.msra.mxu0 %v84
    %183 = vmatprep.subr.mxu0 0.0
    %184 = vmatpush1.msra.mxu0 %v83
    %185 = vmatprep.subr.mxu0 0.0
    %186 = vmatpush2.msra.mxu0 0.0
    %187 = vmatprep.subr.mxu0 0.0
    %188 = vmatpush2.msra.mxu0 0.0
    %189 = vmatprep.subr.mxu0 0.0
    %190 = vmatpush2.msra.mxu0 0.0
    %191 = vmatprep.subr.mxu0 0.0
    %192 = vmatpush2.msra.mxu0 0.0
    %193 = vmatprep.subr.mxu0 0.0
    %194 = vmatpush2.msra.mxu0 0.0
    %195 = vmatprep.subr.mxu0 0.0
    %196 = vmatpush2.msra.mxu0 0.0
    %197 = vmatprep.subr.mxu0 0.0
    %198 = vmatpush2.msra.mxu0 0.0
    %199 = vmatprep.subr.mxu0 0.0
    %200 = vmatpush2.msra.mxu0 0.0
    %201 = vmatprep.subr.mxu0 0.0
    %202 = vmatpush2.msra.mxu0 0.0
    %203 = vmatprep.subr.mxu0 0.0
    %204 = vmatpush2.msra.mxu0 0.0
    %205 = vmatprep.subr.mxu0 0.0
    %206 = vmatpush2.msra.mxu0 0.0
    %207 = vmatprep.subr.mxu0 0.0
    %208 = vmatpush2.msra.mxu0 0.0
    %209 = vmatprep.subr.mxu0 0.0
    %210 = vmatpush2.msra.mxu0 0.0
    %211 = vmatprep.subr.mxu0 0.0
    %212 = vmatpush2.msra.mxu0 0.0
    %213 = vmatprep.subr.mxu0 0.0
    %214 = vmatpush2.msra.mxu0 0.0
    %215 = vmatprep.subr.mxu0 0.0
    %216 = vmatpush2.msra.mxu0 0.0
    %217 = vmatprep.mubr.f32.mxu0 0.0
    %218 = vmatmul.mubr.f32.gmra.mxu0 %v151
    %v219 = vpop.f32.mrf.mxu0
    %v220 = vadd.f32 %v92, %v219
    %v221 = vpop.f32.mrf.mxu0
    %222 = vdwg.mxu0
    %223 = vst [vmem:[#allocation7] sm:$0x3] %v220
    // Predicated region
    $region22: #{tpu_custom_call.1} parent=1 // pred_check
      _
    $region23: #{tpu_custom_call.1} parent=1 // pred_check_branch
      %225 = sbr.rel (0) target = $region25
    $region24: #{tpu_custom_call.1} parent=1 // pred_region
      %s227 = ssub.s32 32, 32
      %228 = vsyncadd [#allocation4], %s227
      %s230 = sshll.u32 [#allocation7], 4
      %s231 = int_to_ptr.vmem [resolvable:$true] %s230
      %233 = dma.vmem_to_hbm [thread:$0]  %s231, 32, %s3, [#allocation4]
    $region25: #{tpu_custom_call.1} parent=1 // pred_fallthru
      _
    // Predicated region
    $region26: #{tpu_custom_call.1} parent=1 // pred_check
      _
    $region27: #{tpu_custom_call.1} parent=1 // pred_check_branch
      %235 = sbr.rel (0) target = $region29
    $region28: #{tpu_custom_call.1} parent=1 // pred_region
      %236 = dma.done [#allocation4], 32
    $region29: #{tpu_custom_call.1} parent=1 // pred_fallthru
      _
    %237 = vsyncpa [#allocation3], 1
    %238 = vsyncpa [#allocation6], 1
    %239 = vsyncpa [#allocation4], 1

</llo_original>
